<compile_context>
chip_gen: v7x
topology: tpu7x:2x2x1
jax: 0.10.0
libtpu: 0.0.40
codegen_flags: <defaults>
</compile_context>

<pallas_src>
import functools

import jax
import jax.numpy as jnp
import numpy as np
from jax.experimental import pallas as pl
from jax.experimental.pallas import tpu as pltpu

# ---------------- model dimensions (roberta-large head) ----------------
NUM_HIDDEN_LAYERS = 24
N_LAYERS = NUM_HIDDEN_LAYERS + 1 - 18   # = 7 weighted hidden states
HIDDEN = 1024                            # roberta-large hidden size
BATCH = 2
SEQ = 8


def _make_kernel(n_layers):
    """Build the kernel for a fixed (static) number of weighted layers."""

    def kernel(lw_ref, rw_ref, rb_ref, *cls_and_out):
        """Softmax layer weighting of CLS tokens + linear regressor (VPU/EUP only).

        lw_ref       : (L, 1, 1)  VMEM  raw layer_weights (pre-softmax), f32
        rw_ref       : (1, H)     VMEM  regressor weight, lane-dense, f32
        rb_ref       : (1, 1)     SMEM  regressor bias, f32
        cls_and_out  : L refs of (Bb, H) CLS blocks (backbone dtype, e.g. bf16)
                       followed by out_ref (Bb, 1) f32
        """
        cls_refs = cls_and_out[:n_layers]
        out_ref = cls_and_out[n_layers]

        # Softmax over the untiled leading L axis: lowers to L-1 elementwise
        # VPU ops + one EUP exp, no cross-lane XLU work.
        lw = lw_ref[...]                                   # (L, 1, 1)
        m = jnp.max(lw, axis=0, keepdims=True)
        e = jnp.exp(lw - m)
        sw = e / jnp.sum(e, axis=0, keepdims=True)         # (L, 1, 1)

        rw = rw_ref[...]                                   # (1, H) f32

        # Dropout(p=0.2) is identity in eval mode.
        # Fold softmax layer weight and regressor weight into one combined
        # per-layer weight and accumulate with an explicitly unrolled loop —
        # no (L, Bb, H) temporary is ever materialized in VMEM.
        acc = cls_refs[0][...].astype(jnp.float32) * (sw[0] * rw)      # (Bb, H)
        for l in range(1, n_layers):
            acc += cls_refs[l][...].astype(jnp.float32) * (sw[l] * rw)

        logits = jnp.sum(acc, axis=-1, keepdims=True)      # (Bb, 1) lane reduce
        out_ref[...] = logits + rb_ref[0, 0]

    return kernel


def _pick_batch_block(batch, dtype):
    """Tile-legal batch block sized against scoped-VMEM and megacore sharding."""
    mult = 16 if dtype == jnp.bfloat16 else 8      # bf16 packs 2 rows / sublane
    cap = 256 if dtype == jnp.bfloat16 else 128    # keeps 2x double-buffered CLS
    #                                               under v5e 16 MiB / v7x 32 MiB
    if batch <= mult or batch % mult != 0:
        return batch                               # single full block (tile-legal)
    blk = min(cap, max(mult, batch // 2))          # prefer >=2 grid steps (2 TCs)
    blk = max(mult, (blk // mult) * mult)
    while batch % blk != 0:                        # avoid padded tail steps
        blk -= mult
    return blk


def cls_token_avg_forward(hidden_layers, layer_weights, reg_w, reg_b,
                          *, batch_block=None):
    """hidden_layers: sequence of L arrays, each (B, S, H) — stands in for
    outputs[2][18:] of the roberta backbone (its native dtype, e.g. bf16)."""
    hidden_layers = list(hidden_layers)
    n_layers = len(hidden_layers)
    B, S, H = hidden_layers[0].shape
    in_dtype = hidden_layers[0].dtype

    if batch_block is None:
        batch_block = _pick_batch_block(B, in_dtype)

    # Free contiguous reshape per layer: collapse (S, H) so the CLS token of
    # every batch row is exactly columns [0, H) of the last dim.  No stack of
    # the full backbone output, no non-CLS bytes ever reach VMEM.
    flats = [h.reshape(B, S * H) for h in hidden_layers]

    lw = layer_weights.reshape(n_layers, 1, 1).astype(jnp.float32)
    rw = reg_w.reshape(1, H).astype(jnp.float32)            # lane-dense
    rb = reg_b.reshape(1, 1).astype(jnp.float32)

    cls_spec = pl.BlockSpec((batch_block, H), lambda i: (i, 0))
    grid = (pl.cdiv(B, batch_block),)

    return pl.pallas_call(
        _make_kernel(n_layers),
        out_shape=jax.ShapeDtypeStruct((B, 1), jnp.float32),
        grid=grid,
        in_specs=[
            pl.BlockSpec((n_layers, 1, 1), lambda i: (0, 0, 0)),   # layer weights
            pl.BlockSpec((1, H), lambda i: (0, 0)),                # regressor weight
            pl.BlockSpec(memory_space=pltpu.SMEM),                 # regressor bias
        ] + [cls_spec] * n_layers,                                 # CLS rows only
        out_specs=pl.BlockSpec((batch_block, 1), lambda i: (i, 0)),
        compiler_params=pltpu.CompilerParams(
            dimension_semantics=("parallel",)),
    )(lw, rw, rb, *flats)


def reference_forward(hidden_layers, layer_weights, reg_w, reg_b):
    """Pure-JAX reference of the torch forward (dropout = identity / eval)."""
    cls_outputs = jnp.stack(
        [layer[:, 0, :].astype(jnp.float32) for layer in hidden_layers], axis=2)
    sw = jax.nn.softmax(layer_weights, axis=0)
    cls_output = jnp.sum(sw * cls_outputs, axis=-1)          # (B, H)
    return cls_output @ reg_w.reshape(1, -1).T.astype(jnp.float32) + reg_b


if __name__ == "__main__":
    key = jax.random.PRNGKey(0)
    keys = jax.random.split(key, N_LAYERS + 2)

    # Synthetic backbone output: 7 per-layer hidden states (B, S, H), bf16
    # (what the backbone would emit; kernel upcasts to f32 internally).
    hidden_layers = [
        jax.random.normal(keys[l], (BATCH, SEQ, HIDDEN), dtype=jnp.float32)
        .astype(jnp.bfloat16)
        for l in range(N_LAYERS)
    ]

    # layer_weights init exactly as in __init__: zeros(7); [:-1] = -3
    layer_weights = jnp.concatenate(
        [jnp.full((N_LAYERS - 1,), -3.0, dtype=jnp.float32),
         jnp.zeros((1,), dtype=jnp.float32)])

    # regressor Linear(1024, 1): weight (1, 1024), bias (1,)
    bound = 1.0 / np.sqrt(HIDDEN)
    reg_w = jax.random.uniform(keys[-2], (1, HIDDEN), jnp.float32, -bound, bound)
    reg_b = jax.random.uniform(keys[-1], (1,), jnp.float32, -bound, bound)

    out = cls_token_avg_forward(hidden_layers, layer_weights, reg_w, reg_b)
    out = jax.block_until_ready(out)

    ref = reference_forward(hidden_layers, layer_weights, reg_w, reg_b)
    assert out.shape == (BATCH, 1)
    np.testing.assert_allclose(np.asarray(out), np.asarray(ref),
                               rtol=1e-3, atol=1e-3)
    print("KERNEL_OK")
</pallas_src>

<mosaic_0001>
module attributes {stable_mosaic.version = 11 : i64} {
  func.func @kernel(%arg0: i32, %arg1: memref<7x1x1xf32, #tpu.memory_space<vmem>>, %arg2: memref<1x1024xf32, #tpu.memory_space<vmem>>, %arg3: memref<1x1xf32, #tpu.memory_space<smem>>, %arg4: memref<2x1024xbf16, #tpu.memory_space<vmem>>, %arg5: memref<2x1024xbf16, #tpu.memory_space<vmem>>, %arg6: memref<2x1024xbf16, #tpu.memory_space<vmem>>, %arg7: memref<2x1024xbf16, #tpu.memory_space<vmem>>, %arg8: memref<2x1024xbf16, #tpu.memory_space<vmem>>, %arg9: memref<2x1024xbf16, #tpu.memory_space<vmem>>, %arg10: memref<2x1024xbf16, #tpu.memory_space<vmem>>, %arg11: memref<2x1xf32, #tpu.memory_space<vmem>>) attributes {dimension_semantics = [#tpu.dimension_semantics<parallel>], iteration_bounds = array<i64: 1>, scalar_prefetch = 0 : i64, scratch_operands = 0 : i64, tpu.core_type = #tpu.core_type<tc>, window_params = [{pipeline_mode = #tpu.pipeline_mode<synchronous>, transform_indices = @transform_0, window_bounds = array<i64: 7, 1, 1>}, {pipeline_mode = #tpu.pipeline_mode<synchronous>, transform_indices = @transform_1, window_bounds = array<i64: 1, 1024>}, {transform_indices = @transform_2, window_bounds = array<i64: 1, 1>}, {transform_indices = @transform_3, window_bounds = array<i64: 2, 1024>}, {transform_indices = @transform_4, window_bounds = array<i64: 2, 1024>}, {transform_indices = @transform_5, window_bounds = array<i64: 2, 1024>}, {transform_indices = @transform_6, window_bounds = array<i64: 2, 1024>}, {transform_indices = @transform_7, window_bounds = array<i64: 2, 1024>}, {transform_indices = @transform_8, window_bounds = array<i64: 2, 1024>}, {transform_indices = @transform_9, window_bounds = array<i64: 2, 1024>}, {transform_indices = @transform_10, window_bounds = array<i64: 2, 1>}]} {
    %c0 = arith.constant 0 : index
    %c0_0 = arith.constant 0 : index
    %c0_1 = arith.constant 0 : index
    %0 = vector.load %arg1[%c0, %c0_0, %c0_1] : memref<7x1x1xf32, #tpu.memory_space<vmem>>, vector<7x1x1xf32>
    %cst = arith.constant dense<0xFF800000> : vector<1x1xf32>
    %1 = vector.multi_reduction <maximumf>, %0, %cst [0] : vector<7x1x1xf32> to vector<1x1xf32>
    %2 = vector.shape_cast %1 : vector<1x1xf32> to vector<1x1x1xf32>
    %3 = vector.broadcast %2 : vector<1x1x1xf32> to vector<7x1x1xf32>
    %4 = arith.subf %0, %3 : vector<7x1x1xf32>
    %5 = math.exp %4 : vector<7x1x1xf32>
    %cst_2 = arith.constant dense<0.000000e+00> : vector<1x1xf32>
    %6 = vector.multi_reduction <add>, %5, %cst_2 [0] : vector<7x1x1xf32> to vector<1x1xf32>
    %7 = vector.shape_cast %6 : vector<1x1xf32> to vector<1x1x1xf32>
    %8 = vector.broadcast %7 : vector<1x1x1xf32> to vector<7x1x1xf32>
    %9 = arith.divf %5, %8 : vector<7x1x1xf32>
    %c0_3 = arith.constant 0 : index
    %c0_4 = arith.constant 0 : index
    %10 = vector.load %arg2[%c0_3, %c0_4] : memref<1x1024xf32, #tpu.memory_space<vmem>>, vector<1x1024xf32>
    %c0_5 = arith.constant 0 : index
    %c0_6 = arith.constant 0 : index
    %11 = vector.load %arg4[%c0_5, %c0_6] : memref<2x1024xbf16, #tpu.memory_space<vmem>>, vector<2x1024xbf16>
    %12 = arith.extf %11 : vector<2x1024xbf16> to vector<2x1024xf32>
    %13 = vector.extract_strided_slice %9 {offsets = [0, 0, 0], sizes = [1, 1, 1], strides = [1, 1, 1]} : vector<7x1x1xf32> to vector<1x1x1xf32>
    %14 = vector.shape_cast %13 : vector<1x1x1xf32> to vector<1x1xf32>
    %15 = vector.broadcast %14 : vector<1x1xf32> to vector<1x1024xf32>
    %16 = arith.mulf %15, %10 : vector<1x1024xf32>
    %17 = vector.broadcast %16 : vector<1x1024xf32> to vector<2x1024xf32>
    %18 = arith.mulf %12, %17 : vector<2x1024xf32>
    %c0_7 = arith.constant 0 : index
    %c0_8 = arith.constant 0 : index
    %19 = vector.load %arg5[%c0_7, %c0_8] : memref<2x1024xbf16, #tpu.memory_space<vmem>>, vector<2x1024xbf16>
    %20 = arith.extf %19 : vector<2x1024xbf16> to vector<2x1024xf32>
    %21 = vector.extract_strided_slice %9 {offsets = [1, 0, 0], sizes = [1, 1, 1], strides = [1, 1, 1]} : vector<7x1x1xf32> to vector<1x1x1xf32>
    %22 = vector.shape_cast %21 : vector<1x1x1xf32> to vector<1x1xf32>
    %23 = vector.broadcast %22 : vector<1x1xf32> to vector<1x1024xf32>
    %24 = arith.mulf %23, %10 : vector<1x1024xf32>
    %25 = vector.broadcast %24 : vector<1x1024xf32> to vector<2x1024xf32>
    %26 = arith.mulf %20, %25 : vector<2x1024xf32>
    %27 = arith.addf %18, %26 : vector<2x1024xf32>
    %c0_9 = arith.constant 0 : index
    %c0_10 = arith.constant 0 : index
    %28 = vector.load %arg6[%c0_9, %c0_10] : memref<2x1024xbf16, #tpu.memory_space<vmem>>, vector<2x1024xbf16>
    %29 = arith.extf %28 : vector<2x1024xbf16> to vector<2x1024xf32>
    %30 = vector.extract_strided_slice %9 {offsets = [2, 0, 0], sizes = [1, 1, 1], strides = [1, 1, 1]} : vector<7x1x1xf32> to vector<1x1x1xf32>
    %31 = vector.shape_cast %30 : vector<1x1x1xf32> to vector<1x1xf32>
    %32 = vector.broadcast %31 : vector<1x1xf32> to vector<1x1024xf32>
    %33 = arith.mulf %32, %10 : vector<1x1024xf32>
    %34 = vector.broadcast %33 : vector<1x1024xf32> to vector<2x1024xf32>
    %35 = arith.mulf %29, %34 : vector<2x1024xf32>
    %36 = arith.addf %27, %35 : vector<2x1024xf32>
    %c0_11 = arith.constant 0 : index
    %c0_12 = arith.constant 0 : index
    %37 = vector.load %arg7[%c0_11, %c0_12] : memref<2x1024xbf16, #tpu.memory_space<vmem>>, vector<2x1024xbf16>
    %38 = arith.extf %37 : vector<2x1024xbf16> to vector<2x1024xf32>
    %39 = vector.extract_strided_slice %9 {offsets = [3, 0, 0], sizes = [1, 1, 1], strides = [1, 1, 1]} : vector<7x1x1xf32> to vector<1x1x1xf32>
    %40 = vector.shape_cast %39 : vector<1x1x1xf32> to vector<1x1xf32>
    %41 = vector.broadcast %40 : vector<1x1xf32> to vector<1x1024xf32>
    %42 = arith.mulf %41, %10 : vector<1x1024xf32>
    %43 = vector.broadcast %42 : vector<1x1024xf32> to vector<2x1024xf32>
    %44 = arith.mulf %38, %43 : vector<2x1024xf32>
    %45 = arith.addf %36, %44 : vector<2x1024xf32>
    %c0_13 = arith.constant 0 : index
    %c0_14 = arith.constant 0 : index
    %46 = vector.load %arg8[%c0_13, %c0_14] : memref<2x1024xbf16, #tpu.memory_space<vmem>>, vector<2x1024xbf16>
    %47 = arith.extf %46 : vector<2x1024xbf16> to vector<2x1024xf32>
    %48 = vector.extract_strided_slice %9 {offsets = [4, 0, 0], sizes = [1, 1, 1], strides = [1, 1, 1]} : vector<7x1x1xf32> to vector<1x1x1xf32>
    %49 = vector.shape_cast %48 : vector<1x1x1xf32> to vector<1x1xf32>
    %50 = vector.broadcast %49 : vector<1x1xf32> to vector<1x1024xf32>
    %51 = arith.mulf %50, %10 : vector<1x1024xf32>
    %52 = vector.broadcast %51 : vector<1x1024xf32> to vector<2x1024xf32>
    %53 = arith.mulf %47, %52 : vector<2x1024xf32>
    %54 = arith.addf %45, %53 : vector<2x1024xf32>
    %c0_15 = arith.constant 0 : index
    %c0_16 = arith.constant 0 : index
    %55 = vector.load %arg9[%c0_15, %c0_16] : memref<2x1024xbf16, #tpu.memory_space<vmem>>, vector<2x1024xbf16>
    %56 = arith.extf %55 : vector<2x1024xbf16> to vector<2x1024xf32>
    %57 = vector.extract_strided_slice %9 {offsets = [5, 0, 0], sizes = [1, 1, 1], strides = [1, 1, 1]} : vector<7x1x1xf32> to vector<1x1x1xf32>
    %58 = vector.shape_cast %57 : vector<1x1x1xf32> to vector<1x1xf32>
    %59 = vector.broadcast %58 : vector<1x1xf32> to vector<1x1024xf32>
    %60 = arith.mulf %59, %10 : vector<1x1024xf32>
    %61 = vector.broadcast %60 : vector<1x1024xf32> to vector<2x1024xf32>
    %62 = arith.mulf %56, %61 : vector<2x1024xf32>
    %63 = arith.addf %54, %62 : vector<2x1024xf32>
    %c0_17 = arith.constant 0 : index
    %c0_18 = arith.constant 0 : index
    %64 = vector.load %arg10[%c0_17, %c0_18] : memref<2x1024xbf16, #tpu.memory_space<vmem>>, vector<2x1024xbf16>
    %65 = arith.extf %64 : vector<2x1024xbf16> to vector<2x1024xf32>
    %66 = vector.extract_strided_slice %9 {offsets = [6, 0, 0], sizes = [1, 1, 1], strides = [1, 1, 1]} : vector<7x1x1xf32> to vector<1x1x1xf32>
    %67 = vector.shape_cast %66 : vector<1x1x1xf32> to vector<1x1xf32>
    %68 = vector.broadcast %67 : vector<1x1xf32> to vector<1x1024xf32>
    %69 = arith.mulf %68, %10 : vector<1x1024xf32>
    %70 = vector.broadcast %69 : vector<1x1024xf32> to vector<2x1024xf32>
    %71 = arith.mulf %65, %70 : vector<2x1024xf32>
    %72 = arith.addf %63, %71 : vector<2x1024xf32>
    %cst_19 = arith.constant dense<0.000000e+00> : vector<2xf32>
    %73 = vector.multi_reduction <add>, %72, %cst_19 [1] : vector<2x1024xf32> to vector<2xf32>
    %74 = vector.shape_cast %73 : vector<2xf32> to vector<2x1xf32>
    %c0_20 = arith.constant 0 : index
    %c0_21 = arith.constant 0 : index
    %75 = memref.load %arg3[%c0_20, %c0_21] : memref<1x1xf32, #tpu.memory_space<smem>>
    %76 = vector.broadcast %75 : f32 to vector<2x1xf32>
    %77 = arith.addf %74, %76 : vector<2x1xf32>
    %c0_22 = arith.constant 0 : index
    %c0_23 = arith.constant 0 : index
    %78 = vector.load %arg11[%c0_22, %c0_23] : memref<2x1xf32, #tpu.memory_space<vmem>>, vector<2x1xf32>
    tpu.vector_store %arg11[%c0_22, %c0_23], %77 {strides = array<i32>} : memref<2x1xf32, #tpu.memory_space<vmem>>, vector<2x1xf32>,
    return
  }
  func.func @transform_0(%arg0: i32) -> (i32, i32, i32) {
    %c0_i32 = arith.constant 0 : i32
    %c0_i32_0 = arith.constant 0 : i32
    %c0_i32_1 = arith.constant 0 : i32
    %c0_i32_2 = arith.constant 0 : i32
    return %c0_i32, %c0_i32_0, %c0_i32_1 : i32, i32, i32
  }
  func.func @transform_1(%arg0: i32) -> (i32, i32) {
    %c0_i32 = arith.constant 0 : i32
    %c0_i32_0 = arith.constant 0 : i32
    %c0_i32_1 = arith.constant 0 : i32
    return %c0_i32, %c0_i32_0 : i32, i32
  }
  func.func @transform_2(%arg0: i32) -> (i32, i32) {
    %c0_i32 = arith.constant 0 : i32
    %c0_i32_0 = arith.constant 0 : i32
    %c0_i32_1 = arith.constant 0 : i32
    return %c0_i32, %c0_i32_0 : i32, i32
  }
  func.func @transform_3(%arg0: i32) -> (i32, i32) {
    %c0_i32 = arith.constant 0 : i32
    %c0_i32_0 = arith.constant 0 : i32
    return %arg0, %c0_i32 : i32, i32
  }
  func.func @transform_4(%arg0: i32) -> (i32, i32) {
    %c0_i32 = arith.constant 0 : i32
    %c0_i32_0 = arith.constant 0 : i32
    return %arg0, %c0_i32 : i32, i32
  }
  func.func @transform_5(%arg0: i32) -> (i32, i32) {
    %c0_i32 = arith.constant 0 : i32
    %c0_i32_0 = arith.constant 0 : i32
    return %arg0, %c0_i32 : i32, i32
  }
  func.func @transform_6(%arg0: i32) -> (i32, i32) {
    %c0_i32 = arith.constant 0 : i32
    %c0_i32_0 = arith.constant 0 : i32
    return %arg0, %c0_i32 : i32, i32
  }
  func.func @transform_7(%arg0: i32) -> (i32, i32) {
    %c0_i32 = arith.constant 0 : i32
    %c0_i32_0 = arith.constant 0 : i32
    return %arg0, %c0_i32 : i32, i32
  }
  func.func @transform_8(%arg0: i32) -> (i32, i32) {
    %c0_i32 = arith.constant 0 : i32
    %c0_i32_0 = arith.constant 0 : i32
    return %arg0, %c0_i32 : i32, i32
  }
  func.func @transform_9(%arg0: i32) -> (i32, i32) {
    %c0_i32 = arith.constant 0 : i32
    %c0_i32_0 = arith.constant 0 : i32
    return %arg0, %c0_i32 : i32, i32
  }
  func.func @transform_10(%arg0: i32) -> (i32, i32) {
    %c0_i32 = arith.constant 0 : i32
    %c0_i32_0 = arith.constant 0 : i32
    return %arg0, %c0_i32 : i32, i32
  }
}

</mosaic_0001>

<llo_original>
// kernel: tpu_custom_call.1
$region0: #{tpu_custom_call.1}
  #allocation0 [shape = 'u32[]', space=smem, size = 0x4, offset = 0x4, fixed_abs, tag = 'smem constant byte address 0x4 - core index']
  #allocation1 [shape = 'u32[144,128]{1,0:T(1,128)}', space=vmem, size = 0x12000, scoped, tag = 'internal scratch']
  #allocation2 [shape = 'f32[1,1]{1,0:T(1,128)S(6)}', space=smem, size = 0x200, scoped, tag = 'scoped memory for tpu_custom_call.1']
  %s0 = inlined_call_operand.vmem [shape: f32[7,1,1], index: 0, kind: input, shape index: {}]
  %s1 = inlined_call_operand.vmem [shape: f32[1,1024], index: 1, kind: input, shape index: {}]
  %s2 = inlined_call_operand.<no memory space> [shape: f32[1,1], index: 2, kind: input, shape index: {}]
  %s3 = inlined_call_operand.hbm [shape: bf16[2,8192], index: 3, kind: input, shape index: {}]
  %s4 = inlined_call_operand.hbm [shape: bf16[2,8192], index: 4, kind: input, shape index: {}]
  %s5 = inlined_call_operand.hbm [shape: bf16[2,8192], index: 5, kind: input, shape index: {}]
  %s6 = inlined_call_operand.hbm [shape: bf16[2,8192], index: 6, kind: input, shape index: {}]
  %s7 = inlined_call_operand.hbm [shape: bf16[2,8192], index: 7, kind: input, shape index: {}]
  %s8 = inlined_call_operand.hbm [shape: bf16[2,8192], index: 8, kind: input, shape index: {}]
  %s9 = inlined_call_operand.hbm [shape: bf16[2,8192], index: 9, kind: input, shape index: {}]
  %s10 = inlined_call_operand.vmem [shape: f32[2,1], index: 10, kind: output, shape index: {}]
  %s11 = sld [smem:[#allocation0]]
  $region78: #{tpu_custom_call.1} parent=0
    _
  %s13 = ssub.s32 1, %s11
  %s14 = scalar_select 0, %s13, %s11
  %15 = sst [smem:[#allocation2]] %s2
  $region1: #{tpu_custom_call.1} parent=0
    #allocation3 [shape = 'u8[4096]{0}', space=vmem, size = 0x1000, scoped, tag = 'input window, operand 3, single buffered']
    #allocation4 [shape = 's32[1]{0}', space=sflag, size = 0x4, scoped, tag = 'scoped memory for tpu_custom_call.1']
    #allocation5 [shape = 'u8[4096]{0}', space=vmem, size = 0x1000, scoped, tag = 'input window, operand 4, single buffered']
    #allocation6 [shape = 's32[1]{0}', space=sflag, size = 0x4, scoped, tag = 'scoped memory for tpu_custom_call.1']
    #allocation7 [shape = 'u8[4096]{0}', space=vmem, size = 0x1000, scoped, tag = 'input window, operand 5, single buffered']
    #allocation8 [shape = 'u8[4096]{0}', space=vmem, size = 0x1000, scoped, tag = 'input window, operand 6, single buffered']
    #allocation9 [shape = 's32[1]{0}', space=sflag, size = 0x4, scoped, tag = 'scoped memory for tpu_custom_call.1']
    #allocation10 [shape = 'u8[4096]{0}', space=vmem, size = 0x1000, scoped, tag = 'input window, operand 7, single buffered']
    #allocation11 [shape = 'u8[4096]{0}', space=vmem, size = 0x1000, scoped, tag = 'input window, operand 8, single buffered']
    #allocation12 [shape = 's32[1]{0}', space=sflag, size = 0x4, scoped, tag = 'scoped memory for tpu_custom_call.1']
    #allocation13 [shape = 'u8[4096]{0}', space=vmem, size = 0x1000, scoped, tag = 'input window, operand 9, single buffered']
    %16 = vsyncpa [#allocation4], 0
    %17 = vsyncpa [#allocation6], 0
    %18 = vsyncpa [#allocation9], 0
    %19 = vsyncpa [#allocation12], 0
    // Predicated region
    $region2: #{tpu_custom_call.1} parent=1 // pred_check
      _
    $region3: #{tpu_custom_call.1} parent=1 // pred_check_branch
      %21 = sbr.rel (0) target = $region5
    $region4: #{tpu_custom_call.1} parent=1 // pred_region
      _
    $region5: #{tpu_custom_call.1} parent=1 // pred_fallthru
      _
    // Predicated region
    $region6: #{tpu_custom_call.1} parent=1 // pred_check
      _
    $region7: #{tpu_custom_call.1} parent=1 // pred_check_branch
      %23 = sbr.rel (0) target = $region9
    $region8: #{tpu_custom_call.1} parent=1 // pred_region
      _
    $region9: #{tpu_custom_call.1} parent=1 // pred_fallthru
      _
    // Predicated region
    $region10: #{tpu_custom_call.1} parent=1 // pred_check
      _
    $region11: #{tpu_custom_call.1} parent=1 // pred_check_branch
      %25 = sbr.rel (0) target = $region13
    $region12: #{tpu_custom_call.1} parent=1 // pred_region
      _
    $region13: #{tpu_custom_call.1} parent=1 // pred_fallthru
      _
    // Predicated region
    $region14: #{tpu_custom_call.1} parent=1 // pred_check
      _
    $region15: #{tpu_custom_call.1} parent=1 // pred_check_branch
      %27 = sbr.rel (0) target = $region17
    $region16: #{tpu_custom_call.1} parent=1 // pred_region
      %s29 = ssub.s32 128, 128
      %30 = vsyncadd [#allocation4], %s29
      %s32 = sshll.u32 [#allocation3], 4
      %s33 = int_to_ptr.vmem [resolvable:$true] %s32
      %35 = dma.hbm_to_vmem [thread:$0]  %s3, 128, %s33, [#allocation4]
    $region17: #{tpu_custom_call.1} parent=1 // pred_fallthru
      _
    // Predicated region
    $region18: #{tpu_custom_call.1} parent=1 // pred_check
      _
    $region19: #{tpu_custom_call.1} parent=1 // pred_check_branch
      %37 = sbr.rel (0) target = $region21
    $region20: #{tpu_custom_call.1} parent=1 // pred_region
      %s39 = ssub.s32 128, 128
      %40 = vsyncadd [#allocation6], %s39
      %s42 = sshll.u32 [#allocation5], 4
      %s43 = int_to_ptr.vmem [resolvable:$true] %s42
      %45 = dma.hbm_to_vmem [thread:$0]  %s4, 128, %s43, [#allocation6]
    $region21: #{tpu_custom_call.1} parent=1 // pred_fallthru
      _
    // Predicated region
    $region22: #{tpu_custom_call.1} parent=1 // pred_check
      _
    $region23: #{tpu_custom_call.1} parent=1 // pred_check_branch
      %47 = sbr.rel (0) target = $region25
    $region24: #{tpu_custom_call.1} parent=1 // pred_region
      %s49 = ssub.s32 128, 128
      %50 = vsyncadd [#allocation6], %s49
      %s52 = sshll.u32 [#allocation7], 4
      %s53 = int_to_ptr.vmem [resolvable:$true] %s52
      %55 = dma.hbm_to_vmem [thread:$0]  %s5, 128, %s53, [#allocation6]
    $region25: #{tpu_custom_call.1} parent=1 // pred_fallthru
      _
    // Predicated region
    $region26: #{tpu_custom_call.1} parent=1 // pred_check
      _
    $region27: #{tpu_custom_call.1} parent=1 // pred_check_branch
      %57 = sbr.rel (0) target = $region29
    $region28: #{tpu_custom_call.1} parent=1 // pred_region
      %s59 = ssub.s32 128, 128
      %60 = vsyncadd [#allocation9], %s59
      %s62 = sshll.u32 [#allocation8], 4
      %s63 = int_to_ptr.vmem [resolvable:$true] %s62
      %65 = dma.hbm_to_vmem [thread:$0]  %s6, 128, %s63, [#allocation9]
    $region29: #{tpu_custom_call.1} parent=1 // pred_fallthru
      _
    // Predicated region
    $region30: #{tpu_custom_call.1} parent=1 // pred_check
      _
    $region31: #{tpu_custom_call.1} parent=1 // pred_check_branch
      %67 = sbr.rel (0) target = $region33
    $region32: #{tpu_custom_call.1} parent=1 // pred_region
      %s69 = ssub.s32 128, 128
      %70 = vsyncadd [#allocation9], %s69
      %s72 = sshll.u32 [#allocation10], 4
      %s73 = int_to_ptr.vmem [resolvable:$true] %s72
      %75 = dma.hbm_to_vmem [thread:$0]  %s7, 128, %s73, [#allocation9]
    $region33: #{tpu_custom_call.1} parent=1 // pred_fallthru
      _
    // Predicated region
    $region34: #{tpu_custom_call.1} parent=1 // pred_check
      _
    $region35: #{tpu_custom_call.1} parent=1 // pred_check_branch
      %77 = sbr.rel (0) target = $region37
    $region36: #{tpu_custom_call.1} parent=1 // pred_region
      %s79 = ssub.s32 128, 128
      %80 = vsyncadd [#allocation12], %s79
      %s82 = sshll.u32 [#allocation11], 4
      %s83 = int_to_ptr.vmem [resolvable:$true] %s82
      %85 = dma.hbm_to_vmem [thread:$0]  %s8, 128, %s83, [#allocation12]
    $region37: #{tpu_custom_call.1} parent=1 // pred_fallthru
      _
    // Predicated region
    $region38: #{tpu_custom_call.1} parent=1 // pred_check
      _
    $region39: #{tpu_custom_call.1} parent=1 // pred_check_branch
      %87 = sbr.rel (0) target = $region41
    $region40: #{tpu_custom_call.1} parent=1 // pred_region
      %s89 = ssub.s32 128, 128
      %90 = vsyncadd [#allocation12], %s89
      %s92 = sshll.u32 [#allocation13], 4
      %s93 = int_to_ptr.vmem [resolvable:$true] %s92
      %95 = dma.hbm_to_vmem [thread:$0]  %s9, 128, %s93, [#allocation12]
    $region41: #{tpu_custom_call.1} parent=1 // pred_fallthru
      _
    // Predicated region
    $region42: #{tpu_custom_call.1} parent=1 // pred_check
      _
    $region43: #{tpu_custom_call.1} parent=1 // pred_check_branch
      %97 = sbr.rel (0) target = $region45
    $region44: #{tpu_custom_call.1} parent=1 // pred_region
      %98 = dma.done [#allocation4], 128
    $region45: #{tpu_custom_call.1} parent=1 // pred_fallthru
      _
    // Predicated region
    $region46: #{tpu_custom_call.1} parent=1 // pred_check
      _
    $region47: #{tpu_custom_call.1} parent=1 // pred_check_branch
      %100 = sbr.rel (0) target = $region49
    $region48: #{tpu_custom_call.1} parent=1 // pred_region
      %101 = dma.done [#allocation6], 128
    $region49: #{tpu_custom_call.1} parent=1 // pred_fallthru
      _
    // Predicated region
    $region50: #{tpu_custom_call.1} parent=1 // pred_check
      _
    $region51: #{tpu_custom_call.1} parent=1 // pred_check_branch
      %103 = sbr.rel (0) target = $region53
    $region52: #{tpu_custom_call.1} parent=1 // pred_region
      %104 = dma.done [#allocation6], 128
    $region53: #{tpu_custom_call.1} parent=1 // pred_fallthru
      _
    // Predicated region
    $region54: #{tpu_custom_call.1} parent=1 // pred_check
      _
    $region55: #{tpu_custom_call.1} parent=1 // pred_check_branch
      %106 = sbr.rel (0) target = $region57
    $region56: #{tpu_custom_call.1} parent=1 // pred_region
      %107 = dma.done [#allocation9], 128
    $region57: #{tpu_custom_call.1} parent=1 // pred_fallthru
      _
    // Predicated region
    $region58: #{tpu_custom_call.1} parent=1 // pred_check
      _
    $region59: #{tpu_custom_call.1} parent=1 // pred_check_branch
      %109 = sbr.rel (0) target = $region61
    $region60: #{tpu_custom_call.1} parent=1 // pred_region
      %110 = dma.done [#allocation9], 128
    $region61: #{tpu_custom_call.1} parent=1 // pred_fallthru
      _
    // Predicated region
    $region62: #{tpu_custom_call.1} parent=1 // pred_check
      _
    $region63: #{tpu_custom_call.1} parent=1 // pred_check_branch
      %112 = sbr.rel (0) target = $region65
    $region64: #{tpu_custom_call.1} parent=1 // pred_region
      %113 = dma.done [#allocation12], 128
    $region65: #{tpu_custom_call.1} parent=1 // pred_fallthru
      _
    // Predicated region
    $region66: #{tpu_custom_call.1} parent=1 // pred_check
      _
    $region67: #{tpu_custom_call.1} parent=1 // pred_check_branch
      %115 = sbr.rel (0) target = $region69
    $region68: #{tpu_custom_call.1} parent=1 // pred_region
      %116 = dma.done [#allocation12], 128
    $region69: #{tpu_custom_call.1} parent=1 // pred_fallthru
      _
    %v117 = vld [vmem:[%s0] sm:$0x1]
    %v118 = vld [vmem:[%s0 + $0x1] sm:$0x1]
    %v119 = vld [vmem:[%s0 + $0x2] sm:$0x1]
    %v120 = vld [vmem:[%s0 + $0x3] sm:$0x1]
    %v121 = vld [vmem:[%s0 + $0x4] sm:$0x1]
    %v122 = vld [vmem:[%s0 + $0x5] sm:$0x1]
    %v123 = vld [vmem:[%s0 + $0x6] sm:$0x1]
    %v124 = vlaneseq
    %vm125 = vcmp.ge.s32.totalorder %v124, 0
    %vm126 = vcmp.lt.s32.totalorder %v124, 1
    %vm127 = vmand %vm125, %vm126
    %v128 = vsel %vm127, %v117, -inf
    %v129 = vsel %vm127, %v118, -inf
    %v130 = vsel %vm127, %v119, -inf
    %v131 = vsel %vm127, %v120, -inf
    %v132 = vsel %vm127, %v121, -inf
    %v133 = vmax.f32 %v128, %v132
    %v134 = vsel %vm127, %v122, -inf
    %v135 = vmax.f32 %v129, %v134
    %v136 = vsel %vm127, %v123, -inf
    %v137 = vmax.f32 %v130, %v136
    %v138 = vmax.f32 %v133, %v135
    %v139 = vmax.f32 %v137, %v131
    %v140 = vmax.f32 %v138, %v139
    %v141 = vsub.f32 %v117, %v140
    %v142 = vsub.f32 %v118, %v140
    %v143 = vsub.f32 %v119, %v140
    %v144 = vsub.f32 %v120, %v140
    %v145 = vsub.f32 %v121, %v140
    %v146 = vsub.f32 %v122, %v140
    %v147 = vsub.f32 %v123, %v140
    %v148 = vmul.f32 %v141, 1.442695
    %v149 = vpow.pop %v148
    %v150 = vmul.f32 %v142, 1.442695
    %v151 = vpow.pop %v150
    %v152 = vmul.f32 %v143, 1.442695
    %v153 = vpow.pop %v152
    %v154 = vmul.f32 %v144, 1.442695
    %v155 = vpow.pop %v154
    %v156 = vmul.f32 %v145, 1.442695
    %v157 = vpow.pop %v156
    %v158 = vmul.f32 %v146, 1.442695
    %v159 = vpow.pop %v158
    %v160 = vmul.f32 %v147, 1.442695
    %v161 = vpow.pop %v160
    %vm162 = vcmask 0
    %v163 = vsel %vm162, %v149, 0.0
    %v164 = vsel %vm162, %v151, 0.0
    %v165 = vadd.f32 %v163, %v164
    %v166 = vsel %vm162, %v153, 0.0
    %v167 = vadd.f32 %v165, %v166
    %v168 = vsel %vm162, %v155, 0.0
    %v169 = vadd.f32 %v167, %v168
    %v170 = vsel %vm162, %v157, 0.0
    %v171 = vadd.f32 %v169, %v170
    %v172 = vsel %vm162, %v159, 0.0
    %v173 = vadd.f32 %v171, %v172
    %v174 = vsel %vm162, %v161, 0.0
    %v175 = vadd.f32 %v173, %v174
    %v176 = vrcp.pop %v175
    %v177 = vmul.f32 %v149, %v176
    %v178 = vmul.f32 %v151, %v176
    %v179 = vmul.f32 %v153, %v176
    %v180 = vmul.f32 %v155, %v176
    %v181 = vmul.f32 %v157, %v176
    %v182 = vmul.f32 %v159, %v176
    %v183 = vmul.f32 %v161, %v176
    %v184 = vld [vmem:[%s1] sm:$0xff]
    %v185 = vld [vmem:[#allocation3] sm:$0xff]
    %v186 = vunpack.c.l.bf16 %v185
    %v187 = vunpack.c.h.bf16 %v185
    %189 = vset.pattern.permute.xlu0 0
    %190 = vperm.xlu0 %189, %v177
    %v191 = vpop.permute.xlu0 %190
    %v193 = vlaneseq
    %v194 = vshrl.u32 %v193, 7
    %v195 = vsub.s32 0, %v194
    %v196 = vrot.slane %v191, %v195
    %v197 = vmul.f32 %v196, %v184
    %v199 = vlaneseq
    %v200 = vshrl.u32 %v199, 7
    %v201 = vsub.s32 0, %v200
    %v202 = vrot.slane %v197, %v201
    %v203 = vlaneseq
    %v204 = vshrl.u32 %v203, 7
    %v205 = vsub.s32 1, %v204
    %v206 = vrot.slane %v197, %v205
    %v207 = vlaneseq
    %v208 = vshrl.u32 %v207, 7
    %v209 = vsub.s32 2, %v208
    %v210 = vrot.slane %v197, %v209
    %v211 = vlaneseq
    %v212 = vshrl.u32 %v211, 7
    %v213 = vsub.s32 3, %v212
    %v214 = vrot.slane %v197, %v213
    %v215 = vlaneseq
    %v216 = vshrl.u32 %v215, 7
    %v217 = vsub.s32 4, %v216
    %v218 = vrot.slane %v197, %v217
    %v219 = vlaneseq
    %v220 = vshrl.u32 %v219, 7
    %v221 = vsub.s32 5, %v220
    %v222 = vrot.slane %v197, %v221
    %v223 = vlaneseq
    %v224 = vshrl.u32 %v223, 7
    %v225 = vsub.s32 6, %v224
    %v226 = vrot.slane %v197, %v225
    %v227 = vlaneseq
    %v228 = vshrl.u32 %v227, 7
    %v229 = vsub.s32 7, %v228
    %v230 = vrot.slane %v197, %v229
    %v231 = vcombine.low %v202, %v206
    %v232 = vcombine.low %v210, %v214
    %v234 = vunpack.c.l.s4 1983009808
    %v235 = vunpack.c.0.s8 %v234
    %v236 = vlaneseq
    %v237 = vshrl.u32 %v236, 7
    %v238 = vsub.s32 %v235, %v237
    %v239 = vrot.slane %v231, %v238
    %v241 = vunpack.c.l.s4 1983009808
    %v242 = vunpack.c.0.s8 %v241
    %v243 = vlaneseq
    %v244 = vshrl.u32 %v243, 7
    %v245 = vsub.s32 %v242, %v244
    %v246 = vrot.slane %v232, %v245
    %v247 = vcombine.low %v239, %v246
    %v248 = vcombine.low %v218, %v222
    %v249 = vcombine.low %v226, %v230
    %v251 = vunpack.c.l.s4 1983009808
    %v252 = vunpack.c.0.s8 %v251
    %v253 = vlaneseq
    %v254 = vshrl.u32 %v253, 7
    %v255 = vsub.s32 %v252, %v254
    %v256 = vrot.slane %v248, %v255
    %v258 = vunpack.c.l.s4 1983009808
    %v259 = vunpack.c.0.s8 %v258
    %v260 = vlaneseq
    %v261 = vshrl.u32 %v260, 7
    %v262 = vsub.s32 %v259, %v261
    %v263 = vrot.slane %v249, %v262
    %v264 = vcombine.low %v256, %v263
    %v267 = vmul.f32 %v186, %v247
    %v268 = vmul.f32 %v187, %v264
    %v269 = vld [vmem:[#allocation5] sm:$0xff]
    %v270 = vunpack.c.l.bf16 %v269
    %v271 = vunpack.c.h.bf16 %v269
    %273 = vset.pattern.permute.xlu0 0
    %274 = vperm.xlu0 %273, %v178
    %v275 = vpop.permute.xlu0 %274
    %v277 = vlaneseq
    %v278 = vshrl.u32 %v277, 7
    %v279 = vsub.s32 0, %v278
    %v280 = vrot.slane %v275, %v279
    %v281 = vmul.f32 %v280, %v184
    %v283 = vlaneseq
    %v284 = vshrl.u32 %v283, 7
    %v285 = vsub.s32 0, %v284
    %v286 = vrot.slane %v281, %v285
    %v287 = vlaneseq
    %v288 = vshrl.u32 %v287, 7
    %v289 = vsub.s32 1, %v288
    %v290 = vrot.slane %v281, %v289
    %v291 = vlaneseq
    %v292 = vshrl.u32 %v291, 7
    %v293 = vsub.s32 2, %v292
    %v294 = vrot.slane %v281, %v293
    %v295 = vlaneseq
    %v296 = vshrl.u32 %v295, 7
    %v297 = vsub.s32 3, %v296
    %v298 = vrot.slane %v281, %v297
    %v299 = vlaneseq
    %v300 = vshrl.u32 %v299, 7
    %v301 = vsub.s32 4, %v300
    %v302 = vrot.slane %v281, %v301
    %v303 = vlaneseq
    %v304 = vshrl.u32 %v303, 7
    %v305 = vsub.s32 5, %v304
    %v306 = vrot.slane %v281, %v305
    %v307 = vlaneseq
    %v308 = vshrl.u32 %v307, 7
    %v309 = vsub.s32 6, %v308
    %v310 = vrot.slane %v281, %v309
    %v311 = vlaneseq
    %v312 = vshrl.u32 %v311, 7
    %v313 = vsub.s32 7, %v312
    %v314 = vrot.slane %v281, %v313
    %v315 = vcombine.low %v286, %v290
    %v316 = vcombine.low %v294, %v298
    %v318 = vunpack.c.l.s4 1983009808
    %v319 = vunpack.c.0.s8 %v318
    %v320 = vlaneseq
    %v321 = vshrl.u32 %v320, 7
    %v322 = vsub.s32 %v319, %v321
    %v323 = vrot.slane %v315, %v322
    %v325 = vunpack.c.l.s4 1983009808
    %v326 = vunpack.c.0.s8 %v325
    %v327 = vlaneseq
    %v328 = vshrl.u32 %v327, 7
    %v329 = vsub.s32 %v326, %v328
    %v330 = vrot.slane %v316, %v329
    %v331 = vcombine.low %v323, %v330
    %v332 = vcombine.low %v302, %v306
    %v333 = vcombine.low %v310, %v314
    %v335 = vunpack.c.l.s4 1983009808
    %v336 = vunpack.c.0.s8 %v335
    %v337 = vlaneseq
    %v338 = vshrl.u32 %v337, 7
    %v339 = vsub.s32 %v336, %v338
    %v340 = vrot.slane %v332, %v339
    %v342 = vunpack.c.l.s4 1983009808
    %v343 = vunpack.c.0.s8 %v342
    %v344 = vlaneseq
    %v345 = vshrl.u32 %v344, 7
    %v346 = vsub.s32 %v343, %v345
    %v347 = vrot.slane %v333, %v346
    %v348 = vcombine.low %v340, %v347
    %v351 = vmul.f32 %v270, %v331
    %v352 = vmul.f32 %v271, %v348
    %v353 = vadd.f32 %v267, %v351
    %v354 = vadd.f32 %v268, %v352
    %v355 = vld [vmem:[#allocation7] sm:$0xff]
    %v356 = vunpack.c.l.bf16 %v355
    %v357 = vunpack.c.h.bf16 %v355
    %359 = vset.pattern.permute.xlu0 0
    %360 = vperm.xlu0 %359, %v179
    %v361 = vpop.permute.xlu0 %360
    %v363 = vlaneseq
    %v364 = vshrl.u32 %v363, 7
    %v365 = vsub.s32 0, %v364
    %v366 = vrot.slane %v361, %v365
    %v367 = vmul.f32 %v366, %v184
    %v369 = vlaneseq
    %v370 = vshrl.u32 %v369, 7
    %v371 = vsub.s32 0, %v370
    %v372 = vrot.slane %v367, %v371
    %v373 = vlaneseq
    %v374 = vshrl.u32 %v373, 7
    %v375 = vsub.s32 1, %v374
    %v376 = vrot.slane %v367, %v375
    %v377 = vlaneseq
    %v378 = vshrl.u32 %v377, 7
    %v379 = vsub.s32 2, %v378
    %v380 = vrot.slane %v367, %v379
    %v381 = vlaneseq
    %v382 = vshrl.u32 %v381, 7
    %v383 = vsub.s32 3, %v382
    %v384 = vrot.slane %v367, %v383
    %v385 = vlaneseq
    %v386 = vshrl.u32 %v385, 7
    %v387 = vsub.s32 4, %v386
    %v388 = vrot.slane %v367, %v387
    %v389 = vlaneseq
    %v390 = vshrl.u32 %v389, 7
    %v391 = vsub.s32 5, %v390
    %v392 = vrot.slane %v367, %v391
    %v393 = vlaneseq
    %v394 = vshrl.u32 %v393, 7
    %v395 = vsub.s32 6, %v394
    %v396 = vrot.slane %v367, %v395
    %v397 = vlaneseq
    %v398 = vshrl.u32 %v397, 7
    %v399 = vsub.s32 7, %v398
    %v400 = vrot.slane %v367, %v399
    %v401 = vcombine.low %v372, %v376
    %v402 = vcombine.low %v380, %v384
    %v404 = vunpack.c.l.s4 1983009808
    %v405 = vunpack.c.0.s8 %v404
    %v406 = vlaneseq
    %v407 = vshrl.u32 %v406, 7
    %v408 = vsub.s32 %v405, %v407
    %v409 = vrot.slane %v401, %v408
    %v411 = vunpack.c.l.s4 1983009808
    %v412 = vunpack.c.0.s8 %v411
    %v413 = vlaneseq
    %v414 = vshrl.u32 %v413, 7
    %v415 = vsub.s32 %v412, %v414
    %v416 = vrot.slane %v402, %v415
    %v417 = vcombine.low %v409, %v416
    %v418 = vcombine.low %v388, %v392
    %v419 = vcombine.low %v396, %v400
    %v421 = vunpack.c.l.s4 1983009808
    %v422 = vunpack.c.0.s8 %v421
    %v423 = vlaneseq
    %v424 = vshrl.u32 %v423, 7
    %v425 = vsub.s32 %v422, %v424
    %v426 = vrot.slane %v418, %v425
    %v428 = vunpack.c.l.s4 1983009808
    %v429 = vunpack.c.0.s8 %v428
    %v430 = vlaneseq
    %v431 = vshrl.u32 %v430, 7
    %v432 = vsub.s32 %v429, %v431
    %v433 = vrot.slane %v419, %v432
    %v434 = vcombine.low %v426, %v433
    %v437 = vmul.f32 %v356, %v417
    %v438 = vmul.f32 %v357, %v434
    %v439 = vadd.f32 %v353, %v437
    %v440 = vadd.f32 %v354, %v438
    %v441 = vld [vmem:[#allocation8] sm:$0xff]
    %v442 = vunpack.c.l.bf16 %v441
    %v443 = vunpack.c.h.bf16 %v441
    %445 = vset.pattern.permute.xlu0 0
    %446 = vperm.xlu0 %445, %v180
    %v447 = vpop.permute.xlu0 %446
    %v449 = vlaneseq
    %v450 = vshrl.u32 %v449, 7
    %v451 = vsub.s32 0, %v450
    %v452 = vrot.slane %v447, %v451
    %v453 = vmul.f32 %v452, %v184
    %v455 = vlaneseq
    %v456 = vshrl.u32 %v455, 7
    %v457 = vsub.s32 0, %v456
    %v458 = vrot.slane %v453, %v457
    %v459 = vlaneseq
    %v460 = vshrl.u32 %v459, 7
    %v461 = vsub.s32 1, %v460
    %v462 = vrot.slane %v453, %v461
    %v463 = vlaneseq
    %v464 = vshrl.u32 %v463, 7
    %v465 = vsub.s32 2, %v464
    %v466 = vrot.slane %v453, %v465
    %v467 = vlaneseq
    %v468 = vshrl.u32 %v467, 7
    %v469 = vsub.s32 3, %v468
    %v470 = vrot.slane %v453, %v469
    %v471 = vlaneseq
    %v472 = vshrl.u32 %v471, 7
    %v473 = vsub.s32 4, %v472
    %v474 = vrot.slane %v453, %v473
    %v475 = vlaneseq
    %v476 = vshrl.u32 %v475, 7
    %v477 = vsub.s32 5, %v476
    %v478 = vrot.slane %v453, %v477
    %v479 = vlaneseq
    %v480 = vshrl.u32 %v479, 7
    %v481 = vsub.s32 6, %v480
    %v482 = vrot.slane %v453, %v481
    %v483 = vlaneseq
    %v484 = vshrl.u32 %v483, 7
    %v485 = vsub.s32 7, %v484
    %v486 = vrot.slane %v453, %v485
    %v487 = vcombine.low %v458, %v462
    %v488 = vcombine.low %v466, %v470
    %v490 = vunpack.c.l.s4 1983009808
    %v491 = vunpack.c.0.s8 %v490
    %v492 = vlaneseq
    %v493 = vshrl.u32 %v492, 7
    %v494 = vsub.s32 %v491, %v493
    %v495 = vrot.slane %v487, %v494
    %v497 = vunpack.c.l.s4 1983009808
    %v498 = vunpack.c.0.s8 %v497
    %v499 = vlaneseq
    %v500 = vshrl.u32 %v499, 7
    %v501 = vsub.s32 %v498, %v500
    %v502 = vrot.slane %v488, %v501
    %v503 = vcombine.low %v495, %v502
    %v504 = vcombine.low %v474, %v478
    %v505 = vcombine.low %v482, %v486
    %v507 = vunpack.c.l.s4 1983009808
    %v508 = vunpack.c.0.s8 %v507
    %v509 = vlaneseq
    %v510 = vshrl.u32 %v509, 7
    %v511 = vsub.s32 %v508, %v510
    %v512 = vrot.slane %v504, %v511
    %v514 = vunpack.c.l.s4 1983009808
    %v515 = vunpack.c.0.s8 %v514
    %v516 = vlaneseq
    %v517 = vshrl.u32 %v516, 7
    %v518 = vsub.s32 %v515, %v517
    %v519 = vrot.slane %v505, %v518
    %v520 = vcombine.low %v512, %v519
    %v523 = vmul.f32 %v442, %v503
    %v524 = vmul.f32 %v443, %v520
    %v525 = vadd.f32 %v439, %v523
    %v526 = vadd.f32 %v440, %v524
    %v527 = vld [vmem:[#allocation10] sm:$0xff]
    %v528 = vunpack.c.l.bf16 %v527
    %v529 = vunpack.c.h.bf16 %v527
    %531 = vset.pattern.permute.xlu0 0
    %532 = vperm.xlu0 %531, %v181
    %v533 = vpop.permute.xlu0 %532
    %v535 = vlaneseq
    %v536 = vshrl.u32 %v535, 7
    %v537 = vsub.s32 0, %v536
    %v538 = vrot.slane %v533, %v537
    %v539 = vmul.f32 %v538, %v184
    %v541 = vlaneseq
    %v542 = vshrl.u32 %v541, 7
    %v543 = vsub.s32 0, %v542
    %v544 = vrot.slane %v539, %v543
    %v545 = vlaneseq
    %v546 = vshrl.u32 %v545, 7
    %v547 = vsub.s32 1, %v546
    %v548 = vrot.slane %v539, %v547
    %v549 = vlaneseq
    %v550 = vshrl.u32 %v549, 7
    %v551 = vsub.s32 2, %v550
    %v552 = vrot.slane %v539, %v551
    %v553 = vlaneseq
    %v554 = vshrl.u32 %v553, 7
    %v555 = vsub.s32 3, %v554
    %v556 = vrot.slane %v539, %v555
    %v557 = vlaneseq
    %v558 = vshrl.u32 %v557, 7
    %v559 = vsub.s32 4, %v558
    %v560 = vrot.slane %v539, %v559
    %v561 = vlaneseq
    %v562 = vshrl.u32 %v561, 7
    %v563 = vsub.s32 5, %v562
    %v564 = vrot.slane %v539, %v563
    %v565 = vlaneseq
    %v566 = vshrl.u32 %v565, 7
    %v567 = vsub.s32 6, %v566
    %v568 = vrot.slane %v539, %v567
    %v569 = vlaneseq
    %v570 = vshrl.u32 %v569, 7
    %v571 = vsub.s32 7, %v570
    %v572 = vrot.slane %v539, %v571
    %v573 = vcombine.low %v544, %v548
    %v574 = vcombine.low %v552, %v556
    %v576 = vunpack.c.l.s4 1983009808
    %v577 = vunpack.c.0.s8 %v576
    %v578 = vlaneseq
    %v579 = vshrl.u32 %v578, 7
    %v580 = vsub.s32 %v577, %v579
    %v581 = vrot.slane %v573, %v580
    %v583 = vunpack.c.l.s4 1983009808
    %v584 = vunpack.c.0.s8 %v583
    %v585 = vlaneseq
    %v586 = vshrl.u32 %v585, 7
    %v587 = vsub.s32 %v584, %v586
    %v588 = vrot.slane %v574, %v587
    %v589 = vcombine.low %v581, %v588
    %v590 = vcombine.low %v560, %v564
    %v591 = vcombine.low %v568, %v572
    %v593 = vunpack.c.l.s4 1983009808
    %v594 = vunpack.c.0.s8 %v593
    %v595 = vlaneseq
    %v596 = vshrl.u32 %v595, 7
    %v597 = vsub.s32 %v594, %v596
    %v598 = vrot.slane %v590, %v597
    %v600 = vunpack.c.l.s4 1983009808
    %v601 = vunpack.c.0.s8 %v600
    %v602 = vlaneseq
    %v603 = vshrl.u32 %v602, 7
    %v604 = vsub.s32 %v601, %v603
    %v605 = vrot.slane %v591, %v604
    %v606 = vcombine.low %v598, %v605
    %v609 = vmul.f32 %v528, %v589
    %v610 = vmul.f32 %v529, %v606
    %v611 = vadd.f32 %v525, %v609
    %v612 = vadd.f32 %v526, %v610
    %v613 = vld [vmem:[#allocation11] sm:$0xff]
    %v614 = vunpack.c.l.bf16 %v613
    %v615 = vunpack.c.h.bf16 %v613
    %617 = vset.pattern.permute.xlu0 0
    %618 = vperm.xlu0 %617, %v182
    %v619 = vpop.permute.xlu0 %618
    %v621 = vlaneseq
    %v622 = vshrl.u32 %v621, 7
    %v623 = vsub.s32 0, %v622
    %v624 = vrot.slane %v619, %v623
    %v625 = vmul.f32 %v624, %v184
    %v627 = vlaneseq
    %v628 = vshrl.u32 %v627, 7
    %v629 = vsub.s32 0, %v628
    %v630 = vrot.slane %v625, %v629
    %v631 = vlaneseq
    %v632 = vshrl.u32 %v631, 7
    %v633 = vsub.s32 1, %v632
    %v634 = vrot.slane %v625, %v633
    %v635 = vlaneseq
    %v636 = vshrl.u32 %v635, 7
    %v637 = vsub.s32 2, %v636
    %v638 = vrot.slane %v625, %v637
    %v639 = vlaneseq
    %v640 = vshrl.u32 %v639, 7
    %v641 = vsub.s32 3, %v640
    %v642 = vrot.slane %v625, %v641
    %v643 = vlaneseq
    %v644 = vshrl.u32 %v643, 7
    %v645 = vsub.s32 4, %v644
    %v646 = vrot.slane %v625, %v645
    %v647 = vlaneseq
    %v648 = vshrl.u32 %v647, 7
    %v649 = vsub.s32 5, %v648
    %v650 = vrot.slane %v625, %v649
    %v651 = vlaneseq
    %v652 = vshrl.u32 %v651, 7
    %v653 = vsub.s32 6, %v652
    %v654 = vrot.slane %v625, %v653
    %v655 = vlaneseq
    %v656 = vshrl.u32 %v655, 7
    %v657 = vsub.s32 7, %v656
    %v658 = vrot.slane %v625, %v657
    %v659 = vcombine.low %v630, %v634
    %v660 = vcombine.low %v638, %v642
    %v662 = vunpack.c.l.s4 1983009808
    %v663 = vunpack.c.0.s8 %v662
    %v664 = vlaneseq
    %v665 = vshrl.u32 %v664, 7
    %v666 = vsub.s32 %v663, %v665
    %v667 = vrot.slane %v659, %v666
    %v669 = vunpack.c.l.s4 1983009808
    %v670 = vunpack.c.0.s8 %v669
    %v671 = vlaneseq
    %v672 = vshrl.u32 %v671, 7
    %v673 = vsub.s32 %v670, %v672
    %v674 = vrot.slane %v660, %v673
    %v675 = vcombine.low %v667, %v674
    %v676 = vcombine.low %v646, %v650
    %v677 = vcombine.low %v654, %v658
    %v679 = vunpack.c.l.s4 1983009808
    %v680 = vunpack.c.0.s8 %v679
    %v681 = vlaneseq
    %v682 = vshrl.u32 %v681, 7
    %v683 = vsub.s32 %v680, %v682
    %v684 = vrot.slane %v676, %v683
    %v686 = vunpack.c.l.s4 1983009808
    %v687 = vunpack.c.0.s8 %v686
    %v688 = vlaneseq
    %v689 = vshrl.u32 %v688, 7
    %v690 = vsub.s32 %v687, %v689
    %v691 = vrot.slane %v677, %v690
    %v692 = vcombine.low %v684, %v691
    %v695 = vmul.f32 %v614, %v675
    %v696 = vmul.f32 %v615, %v692
    %v697 = vadd.f32 %v611, %v695
    %v698 = vadd.f32 %v612, %v696
    %v699 = vld [vmem:[#allocation13] sm:$0xff]
    %v700 = vunpack.c.l.bf16 %v699
    %v701 = vunpack.c.h.bf16 %v699
    %703 = vset.pattern.permute.xlu0 0
    %704 = vperm.xlu0 %703, %v183
    %v705 = vpop.permute.xlu0 %704
    %v707 = vlaneseq
    %v708 = vshrl.u32 %v707, 7
    %v709 = vsub.s32 0, %v708
    %v710 = vrot.slane %v705, %v709
    %v711 = vmul.f32 %v710, %v184
    %v713 = vlaneseq
    %v714 = vshrl.u32 %v713, 7
    %v715 = vsub.s32 0, %v714
    %v716 = vrot.slane %v711, %v715
    %v717 = vlaneseq
    %v718 = vshrl.u32 %v717, 7
    %v719 = vsub.s32 1, %v718
    %v720 = vrot.slane %v711, %v719
    %v721 = vlaneseq
    %v722 = vshrl.u32 %v721, 7
    %v723 = vsub.s32 2, %v722
    %v724 = vrot.slane %v711, %v723
    %v725 = vlaneseq
    %v726 = vshrl.u32 %v725, 7
    %v727 = vsub.s32 3, %v726
    %v728 = vrot.slane %v711, %v727
    %v729 = vlaneseq
    %v730 = vshrl.u32 %v729, 7
    %v731 = vsub.s32 4, %v730
    %v732 = vrot.slane %v711, %v731
    %v733 = vlaneseq
    %v734 = vshrl.u32 %v733, 7
    %v735 = vsub.s32 5, %v734
    %v736 = vrot.slane %v711, %v735
    %v737 = vlaneseq
    %v738 = vshrl.u32 %v737, 7
    %v739 = vsub.s32 6, %v738
    %v740 = vrot.slane %v711, %v739
    %v741 = vlaneseq
    %v742 = vshrl.u32 %v741, 7
    %v743 = vsub.s32 7, %v742
    %v744 = vrot.slane %v711, %v743
    %v745 = vcombine.low %v716, %v720
    %v746 = vcombine.low %v724, %v728
    %v748 = vunpack.c.l.s4 1983009808
    %v749 = vunpack.c.0.s8 %v748
    %v750 = vlaneseq
    %v751 = vshrl.u32 %v750, 7
    %v752 = vsub.s32 %v749, %v751
    %v753 = vrot.slane %v745, %v752
    %v755 = vunpack.c.l.s4 1983009808
    %v756 = vunpack.c.0.s8 %v755
    %v757 = vlaneseq
    %v758 = vshrl.u32 %v757, 7
    %v759 = vsub.s32 %v756, %v758
    %v760 = vrot.slane %v746, %v759
    %v761 = vcombine.low %v753, %v760
    %v762 = vcombine.low %v732, %v736
    %v763 = vcombine.low %v740, %v744
    %v765 = vunpack.c.l.s4 1983009808
    %v766 = vunpack.c.0.s8 %v765
    %v767 = vlaneseq
    %v768 = vshrl.u32 %v767, 7
    %v769 = vsub.s32 %v766, %v768
    %v770 = vrot.slane %v762, %v769
    %v772 = vunpack.c.l.s4 1983009808
    %v773 = vunpack.c.0.s8 %v772
    %v774 = vlaneseq
    %v775 = vshrl.u32 %v774, 7
    %v776 = vsub.s32 %v773, %v775
    %v777 = vrot.slane %v763, %v776
    %v778 = vcombine.low %v770, %v777
    %v781 = vmul.f32 %v700, %v761
    %v782 = vmul.f32 %v701, %v778
    %v783 = vadd.f32 %v697, %v781
    %v784 = vadd.f32 %v698, %v782
    %v787 = vcombine.high %v783, %v783
    %v789 = vunpack.c.l.s4 1983009808
    %v790 = vunpack.c.0.s8 %v789
    %v791 = vlaneseq
    %v792 = vshrl.u32 %v791, 7
    %v793 = vsub.s32 %v790, %v792
    %v794 = vrot.slane %v783, %v793
    %v796 = vunpack.c.l.s4 1983009808
    %v797 = vunpack.c.0.s8 %v796
    %v798 = vlaneseq
    %v799 = vshrl.u32 %v798, 7
    %v800 = vsub.s32 %v797, %v799
    %v801 = vrot.slane %v787, %v800
    %v802 = vcombine.high %v794, %v794
    %v803 = vcombine.high %v801, %v801
    %v804 = vcombine.high %v784, %v784
    %v806 = vunpack.c.l.s4 1983009808
    %v807 = vunpack.c.0.s8 %v806
    %v808 = vlaneseq
    %v809 = vshrl.u32 %v808, 7
    %v810 = vsub.s32 %v807, %v809
    %v811 = vrot.slane %v784, %v810
    %v813 = vunpack.c.l.s4 1983009808
    %v814 = vunpack.c.0.s8 %v813
    %v815 = vlaneseq
    %v816 = vshrl.u32 %v815, 7
    %v817 = vsub.s32 %v814, %v816
    %v818 = vrot.slane %v804, %v817
    %v819 = vcombine.high %v811, %v811
    %v820 = vcombine.high %v818, %v818
    %vm829 = vcmask 1041408
    %v830 = vsel %vm829, %v794, 0.0
    %v831 = vsel %vm829, %v802, 0.0
    %v832 = vadd.f32 %v830, %v831
    %v833 = vsel %vm829, %v801, 0.0
    %v834 = vadd.f32 %v832, %v833
    %v835 = vsel %vm829, %v803, 0.0
    %v836 = vadd.f32 %v834, %v835
    %v837 = vsel %vm829, %v811, 0.0
    %v838 = vadd.f32 %v836, %v837
    %v839 = vsel %vm829, %v819, 0.0
    %v840 = vadd.f32 %v838, %v839
    %v841 = vsel %vm829, %v818, 0.0
    %v842 = vadd.f32 %v840, %v841
    %v843 = vsel %vm829, %v820, 0.0
    %v844 = vadd.f32 %v842, %v843
    %845 = vadd.xlane.f32.xlu0 %v844
    %v846 = vpop.xlane.xlu0 %845
    %s847 = sld [smem:[#allocation2]]
    %v848 = vstv %s847
    %v849 = vadd.f32 %v846, %v848
    %vm850 = vcmask 1024
    %851 = vst.msk [vmem:[%s10] sm:$0x3] %vm850, %v849
    // Predicated region
    $region70: #{tpu_custom_call.1} parent=1 // pred_check
      _
    $region71: #{tpu_custom_call.1} parent=1 // pred_check_branch
      %853 = sbr.rel (0) target = $region73
    $region72: #{tpu_custom_call.1} parent=1 // pred_region
      _
    $region73: #{tpu_custom_call.1} parent=1 // pred_fallthru
      _
    // Predicated region
    $region74: #{tpu_custom_call.1} parent=1 // pred_check
      _
    $region75: #{tpu_custom_call.1} parent=1 // pred_check_branch
      %855 = sbr.rel (0) target = $region77
    $region76: #{tpu_custom_call.1} parent=1 // pred_region
      _
    $region77: #{tpu_custom_call.1} parent=1 // pred_fallthru
      _
    %856 = vsyncpa [#allocation4], 1
    %857 = vsyncpa [#allocation6], 1
    %858 = vsyncpa [#allocation9], 1
    %859 = vsyncpa [#allocation12], 1

</llo_original>
